<compile_context>
chip_gen: v5e
topology: v5e:2x2
jax: 0.10.0
libtpu: 0.0.40
codegen_flags: <defaults>
</compile_context>

<pallas_src>
import functools

import jax
import jax.numpy as jnp
from jax import lax
from jax.experimental import pallas as pl
from jax.experimental.pallas import tpu as pltpu


def _cost_kernel(slab_ref, o_ref, *, n, lambda_bias, alpha, beta,
                 w_pose, w_bias, w_smooth):
    sl = slab_ref[...]                                    # (16, Npad) f32
    n_pad = sl.shape[1]
    zero = jnp.float32(0.0)

    # ---------------- pose: MSE over the 4 pose channels -------------------
    # rows 0-3 (out) and rows 8-11 (targets) sit at identical sublane offsets
    # of their 8-row tiles -> one full-tile subtract, no sublane realign.
    pd = sl[0:8, :] - sl[8:16, :]                         # (8, Npad); rows 4-7 junk/zero
    pdsq = pd * pd
    # 4-wide sublane sum (rows 0..3) via 2 sublane rolls + 2 adds; read row 0.
    t = pdsq + pltpu.roll(pdsq, shift=6, axis=0)          # row0 = r0 + r2
    t = t + pltpu.roll(t, shift=7, axis=0)                # row0 = r0+r1+r2+r3
    pose_row = t[0:1, :]                                  # (1, Npad); pad lanes are 0

    # ---------------- bias regularization: per-step L2 norms ---------------
    sq = sl * sl                                          # (16, Npad)
    s3 = (sq + pltpu.roll(sq, shift=15, axis=0)           # row r = sq[r]+sq[r+1]+sq[r+2]
             + pltpu.roll(sq, shift=14, axis=0))
    ba_norm = jnp.sqrt(s3[4:5, :])                        # ||ba|| per step
    bg_norm = jnp.sqrt(s3[12:13, :])                      # ||bg|| per step
    bias_row = ba_norm + bg_norm                          # (1, Npad); pad lanes are 0

    # ---------------- smoothness: consecutive diffs of ba / bg -------------
    d = sl - pltpu.roll(sl, shift=1, axis=1)              # pos i: x[i] - x[i-1]
    dsq = d * d
    d3 = (dsq + pltpu.roll(dsq, shift=15, axis=0)
              + pltpu.roll(dsq, shift=14, axis=0))
    lane = lax.broadcasted_iota(jnp.int32, (1, n_pad), 1)
    valid = (lane >= 1) & (lane <= n - 1)                 # drop wrap lane 0 and lanes >= n
    dba_norm = jnp.where(valid, jnp.sqrt(d3[4:5, :]), zero)
    dbg_norm = jnp.where(valid, jnp.sqrt(d3[12:13, :]), zero)

    # ---------------- lane reduces + scalar epilogue ------------------------
    # TODO(synk): for very large N, reduce per lane-tile first (or add a lane
    # grid with a VMEM accumulator) to limit single-pass f32 summation drift.
    pose_sum = jnp.sum(pose_row)
    bias_sum = jnp.sum(bias_row)
    sba_sum = jnp.sum(dba_norm)
    sbg_sum = jnp.sum(dbg_norm)

    inv_n = jnp.float32(1.0 / n)
    loss_pose = pose_sum * inv_n
    loss_bias = jnp.float32(lambda_bias) * inv_n * bias_sum
    loss_smooth = jnp.float32(alpha) * sba_sum + jnp.float32(beta) * sbg_sum
    total = (jnp.float32(w_pose) * loss_pose
             + jnp.float32(w_bias) * loss_bias
             + jnp.float32(w_smooth) * loss_smooth)

    # Lane-dense packed store: results live in lanes 0..3 of one (1, 128) row.
    out_lane = lax.broadcasted_iota(jnp.int32, (1, 128), 1)
    row = jnp.where(out_lane == 0, total, zero)
    row = jnp.where(out_lane == 1, loss_pose, row)
    row = jnp.where(out_lane == 2, loss_bias, row)
    row = jnp.where(out_lane == 3, loss_smooth, row)
    o_ref[...] = row


def customize_cost(out, out_ba, out_bg,
                   target_x, target_y, target_yaw_sin, target_yaw_cos,
                   *, lambda_bias=1e-4, smooth_alpha=1e-4, smooth_beta=1e-4,
                   weight_pose=1.0, weight_bias=1.0, weight_smooth=1.0):
    n = out.shape[0]
    n_pad = max(128, pl.cdiv(n, 128) * 128)
    f32 = jnp.float32

    # Pack everything into one lane-dense, tile-aligned (16, Npad) slab.
    zrow = jnp.zeros((1, n), f32)
    targets = jnp.stack([target_x, target_y, target_yaw_sin, target_yaw_cos],
                        axis=0).astype(f32)                          # (4, N)
    slab = jnp.concatenate(
        [out.T.astype(f32), out_ba.T.astype(f32), zrow,              # tile 0
         targets, out_bg.T.astype(f32), zrow], axis=0)               # tile 1
    slab = jnp.pad(slab, ((0, 0), (0, n_pad - n)))                   # (16, Npad)

    kernel = functools.partial(
        _cost_kernel, n=n,
        lambda_bias=lambda_bias, alpha=smooth_alpha, beta=smooth_beta,
        w_pose=weight_pose, w_bias=weight_bias, w_smooth=weight_smooth)

    slab_bytes = 16 * n_pad * 4
    # TODO(synk): for N beyond a few hundred K steps, switch to a lane-axis
    # grid with an accumulator instead of raising the VMEM limit further
    # (v7x has only 64 MiB VMEM per TensorCore).
    vmem_limit = int(min(48 * 1024 * 1024,
                         max(32 * 1024 * 1024, 3 * slab_bytes)))

    vmem = pl.BlockSpec(memory_space=pltpu.MemorySpace.VMEM)
    res = pl.pallas_call(
        kernel,
        out_shape=jax.ShapeDtypeStruct((1, 128), f32),
        in_specs=[vmem],
        out_specs=vmem,
        compiler_params=pltpu.CompilerParams(
            allow_input_fusion=[True],      # fuse the pack into the input DMA
            vmem_limit_bytes=vmem_limit),
    )(slab)

    vals = res[0, :4]
    return vals[0], vals[1], vals[2], vals[3]


def _reference(out, out_ba, out_bg, tx, ty, ts, tc,
               lambda_bias=1e-4, alpha=1e-4, beta=1e-4,
               wp=1.0, wb=1.0, ws=1.0):
    loss_ba = jnp.mean(jnp.linalg.norm(out_ba, axis=1))
    loss_bg = jnp.mean(jnp.linalg.norm(out_bg, axis=1))
    loss_bias_reg = lambda_bias * (loss_ba + loss_bg)
    smooth_ba = jnp.sum(jnp.linalg.norm(out_ba[1:] - out_ba[:-1], axis=1))
    smooth_bg = jnp.sum(jnp.linalg.norm(out_bg[1:] - out_bg[:-1], axis=1))
    loss_smooth = alpha * smooth_ba + beta * smooth_bg
    loss_pose = (jnp.mean((out[:, 0] - tx) ** 2) + jnp.mean((out[:, 1] - ty) ** 2)
                 + jnp.mean((out[:, 2] - ts) ** 2) + jnp.mean((out[:, 3] - tc) ** 2))
    total = wp * loss_pose + wb * loss_bias_reg + ws * loss_smooth
    return total, loss_pose, loss_bias_reg, loss_smooth


if __name__ == "__main__":
    key = jax.random.PRNGKey(0)
    ks = jax.random.split(key, 7)
    N = 8
    out = jax.random.normal(ks[0], (N, 4), jnp.float32)
    out_ba = jax.random.normal(ks[1], (N, 3), jnp.float32)
    out_bg = jax.random.normal(ks[2], (N, 3), jnp.float32)
    target_x = jax.random.normal(ks[3], (N,), jnp.float32)
    target_y = jax.random.normal(ks[4], (N,), jnp.float32)
    target_yaw_sin = jax.random.normal(ks[5], (N,), jnp.float32)
    target_yaw_cos = jax.random.normal(ks[6], (N,), jnp.float32)

    fn = jax.jit(customize_cost)   # single XLA program -> pack fuses into the kernel
    res = jax.block_until_ready(
        fn(out, out_ba, out_bg, target_x, target_y, target_yaw_sin, target_yaw_cos))

    ref = _reference(out, out_ba, out_bg,
                     target_x, target_y, target_yaw_sin, target_yaw_cos)
    for a, b in zip(res, ref):
        assert jnp.allclose(a, b, rtol=1e-5, atol=1e-5), (a, b)

    print("KERNEL_OK")
</pallas_src>

<mosaic_0001>
module attributes {stable_mosaic.version = 11 : i64} {
  func.func @_cost_kernel(%arg0: memref<16x128xf32, #tpu.memory_space<vmem>>, %arg1: memref<1x128xf32, #tpu.memory_space<vmem>>) attributes {dimension_semantics = [], scalar_prefetch = 0 : i64, scratch_operands = 0 : i64, tpu.core_type = #tpu.core_type<tc>} {
    %c0 = arith.constant 0 : index
    %c0_0 = arith.constant 0 : index
    %0 = vector.load %arg0[%c0, %c0_0] : memref<16x128xf32, #tpu.memory_space<vmem>>, vector<16x128xf32>
    %1 = vector.extract_strided_slice %0 {offsets = [0, 0], sizes = [8, 128], strides = [1, 1]} : vector<16x128xf32> to vector<8x128xf32>
    %2 = vector.extract_strided_slice %0 {offsets = [8, 0], sizes = [8, 128], strides = [1, 1]} : vector<16x128xf32> to vector<8x128xf32>
    %3 = arith.subf %1, %2 : vector<8x128xf32>
    %4 = arith.mulf %3, %3 : vector<8x128xf32>
    %c6_i32 = arith.constant 6 : i32
    %5 = tpu.dynamic_rotate %4 by %c6_i32 dim 0 : vector<8x128xf32>, i32 -> vector<8x128xf32>
    %6 = arith.addf %4, %5 : vector<8x128xf32>
    %c7_i32 = arith.constant 7 : i32
    %7 = tpu.dynamic_rotate %6 by %c7_i32 dim 0 : vector<8x128xf32>, i32 -> vector<8x128xf32>
    %8 = arith.addf %6, %7 : vector<8x128xf32>
    %9 = vector.extract_strided_slice %8 {offsets = [0, 0], sizes = [1, 128], strides = [1, 1]} : vector<8x128xf32> to vector<1x128xf32>
    %10 = arith.mulf %0, %0 : vector<16x128xf32>
    %c15_i32 = arith.constant 15 : i32
    %11 = tpu.dynamic_rotate %10 by %c15_i32 dim 0 : vector<16x128xf32>, i32 -> vector<16x128xf32>
    %12 = arith.addf %10, %11 : vector<16x128xf32>
    %c14_i32 = arith.constant 14 : i32
    %13 = tpu.dynamic_rotate %10 by %c14_i32 dim 0 : vector<16x128xf32>, i32 -> vector<16x128xf32>
    %14 = arith.addf %12, %13 : vector<16x128xf32>
    %15 = vector.extract_strided_slice %14 {offsets = [4, 0], sizes = [1, 128], strides = [1, 1]} : vector<16x128xf32> to vector<1x128xf32>
    %16 = math.sqrt %15 : vector<1x128xf32>
    %17 = vector.extract_strided_slice %14 {offsets = [12, 0], sizes = [1, 128], strides = [1, 1]} : vector<16x128xf32> to vector<1x128xf32>
    %18 = math.sqrt %17 : vector<1x128xf32>
    %19 = arith.addf %16, %18 : vector<1x128xf32>
    %c1_i32 = arith.constant 1 : i32
    %20 = tpu.dynamic_rotate %0 by %c1_i32 dim 1 : vector<16x128xf32>, i32 -> vector<16x128xf32>
    %21 = arith.subf %0, %20 : vector<16x128xf32>
    %22 = arith.mulf %21, %21 : vector<16x128xf32>
    %c15_i32_1 = arith.constant 15 : i32
    %23 = tpu.dynamic_rotate %22 by %c15_i32_1 dim 0 : vector<16x128xf32>, i32 -> vector<16x128xf32>
    %24 = arith.addf %22, %23 : vector<16x128xf32>
    %c14_i32_2 = arith.constant 14 : i32
    %25 = tpu.dynamic_rotate %22 by %c14_i32_2 dim 0 : vector<16x128xf32>, i32 -> vector<16x128xf32>
    %26 = arith.addf %24, %25 : vector<16x128xf32>
    %27 = tpu.iota {dimensions = array<i32: 1>} : vector<1x128xi32>
    %c1_i32_3 = arith.constant 1 : i32
    %28 = vector.broadcast %c1_i32_3 : i32 to vector<1x128xi32>
    %29 = arith.cmpi sge, %27, %28 : vector<1x128xi32>
    %c7_i32_4 = arith.constant 7 : i32
    %30 = vector.broadcast %c7_i32_4 : i32 to vector<1x128xi32>
    %31 = arith.cmpi sle, %27, %30 : vector<1x128xi32>
    %32 = arith.andi %29, %31 : vector<1x128xi1>
    %33 = vector.extract_strided_slice %26 {offsets = [4, 0], sizes = [1, 128], strides = [1, 1]} : vector<16x128xf32> to vector<1x128xf32>
    %34 = math.sqrt %33 : vector<1x128xf32>
    %cst = arith.constant 0.000000e+00 : f32
    %35 = vector.broadcast %cst : f32 to vector<1x128xf32>
    %36 = arith.select %32, %34, %35 : vector<1x128xi1>, vector<1x128xf32>
    %37 = vector.extract_strided_slice %26 {offsets = [12, 0], sizes = [1, 128], strides = [1, 1]} : vector<16x128xf32> to vector<1x128xf32>
    %38 = math.sqrt %37 : vector<1x128xf32>
    %cst_5 = arith.constant 0.000000e+00 : f32
    %39 = vector.broadcast %cst_5 : f32 to vector<1x128xf32>
    %40 = arith.select %32, %38, %39 : vector<1x128xi1>, vector<1x128xf32>
    %41 = vector.shape_cast %9 : vector<1x128xf32> to vector<1x1x128xf32>
    %cst_6 = arith.constant dense<0.000000e+00> : vector<1xf32>
    %42 = vector.multi_reduction <add>, %41, %cst_6 [1, 2] : vector<1x1x128xf32> to vector<1xf32>
    %43 = vector.shape_cast %42 : vector<1xf32> to vector<1x1x1xf32>
    %44 = vector.extract %43[0, 0, 0] : f32 from vector<1x1x1xf32>
    %45 = vector.shape_cast %19 : vector<1x128xf32> to vector<1x1x128xf32>
    %cst_7 = arith.constant dense<0.000000e+00> : vector<1xf32>
    %46 = vector.multi_reduction <add>, %45, %cst_7 [1, 2] : vector<1x1x128xf32> to vector<1xf32>
    %47 = vector.shape_cast %46 : vector<1xf32> to vector<1x1x1xf32>
    %48 = vector.extract %47[0, 0, 0] : f32 from vector<1x1x1xf32>
    %49 = vector.shape_cast %36 : vector<1x128xf32> to vector<1x1x128xf32>
    %cst_8 = arith.constant dense<0.000000e+00> : vector<1xf32>
    %50 = vector.multi_reduction <add>, %49, %cst_8 [1, 2] : vector<1x1x128xf32> to vector<1xf32>
    %51 = vector.shape_cast %50 : vector<1xf32> to vector<1x1x1xf32>
    %52 = vector.extract %51[0, 0, 0] : f32 from vector<1x1x1xf32>
    %53 = vector.shape_cast %40 : vector<1x128xf32> to vector<1x1x128xf32>
    %cst_9 = arith.constant dense<0.000000e+00> : vector<1xf32>
    %54 = vector.multi_reduction <add>, %53, %cst_9 [1, 2] : vector<1x1x128xf32> to vector<1xf32>
    %55 = vector.shape_cast %54 : vector<1xf32> to vector<1x1x1xf32>
    %56 = vector.extract %55[0, 0, 0] : f32 from vector<1x1x1xf32>
    %cst_10 = arith.constant 1.250000e-01 : f32
    %57 = arith.mulf %44, %cst_10 : f32
    %cst_11 = arith.constant 9.99999974E-5 : f32
    %cst_12 = arith.constant 1.250000e-01 : f32
    %58 = arith.mulf %cst_11, %cst_12 : f32
    %59 = arith.mulf %58, %48 : f32
    %cst_13 = arith.constant 9.99999974E-5 : f32
    %60 = arith.mulf %cst_13, %52 : f32
    %cst_14 = arith.constant 9.99999974E-5 : f32
    %61 = arith.mulf %cst_14, %56 : f32
    %62 = arith.addf %60, %61 : f32
    %cst_15 = arith.constant 1.000000e+00 : f32
    %63 = arith.mulf %cst_15, %57 : f32
    %cst_16 = arith.constant 1.000000e+00 : f32
    %64 = arith.mulf %cst_16, %59 : f32
    %65 = arith.addf %63, %64 : f32
    %cst_17 = arith.constant 1.000000e+00 : f32
    %66 = arith.mulf %cst_17, %62 : f32
    %67 = arith.addf %65, %66 : f32
    %68 = tpu.iota {dimensions = array<i32: 1>} : vector<1x128xi32>
    %c0_i32 = arith.constant 0 : i32
    %69 = vector.broadcast %c0_i32 : i32 to vector<1x128xi32>
    %70 = arith.cmpi eq, %68, %69 : vector<1x128xi32>
    %cst_18 = arith.constant 0.000000e+00 : f32
    %71 = vector.broadcast %67 : f32 to vector<1x128xf32>
    %72 = vector.broadcast %cst_18 : f32 to vector<1x128xf32>
    %73 = arith.select %70, %71, %72 : vector<1x128xi1>, vector<1x128xf32>
    %c1_i32_19 = arith.constant 1 : i32
    %74 = vector.broadcast %c1_i32_19 : i32 to vector<1x128xi32>
    %75 = arith.cmpi eq, %68, %74 : vector<1x128xi32>
    %76 = vector.broadcast %57 : f32 to vector<1x128xf32>
    %77 = arith.select %75, %76, %73 : vector<1x128xi1>, vector<1x128xf32>
    %c2_i32 = arith.constant 2 : i32
    %78 = vector.broadcast %c2_i32 : i32 to vector<1x128xi32>
    %79 = arith.cmpi eq, %68, %78 : vector<1x128xi32>
    %80 = vector.broadcast %59 : f32 to vector<1x128xf32>
    %81 = arith.select %79, %80, %77 : vector<1x128xi1>, vector<1x128xf32>
    %c3_i32 = arith.constant 3 : i32
    %82 = vector.broadcast %c3_i32 : i32 to vector<1x128xi32>
    %83 = arith.cmpi eq, %68, %82 : vector<1x128xi32>
    %84 = vector.broadcast %62 : f32 to vector<1x128xf32>
    %85 = arith.select %83, %84, %81 : vector<1x128xi1>, vector<1x128xf32>
    %c0_20 = arith.constant 0 : index
    %c0_21 = arith.constant 0 : index
    %86 = vector.load %arg1[%c0_20, %c0_21] : memref<1x128xf32, #tpu.memory_space<vmem>>, vector<1x128xf32>
    tpu.vector_store %arg1[%c0_20, %c0_21], %85 {strides = array<i32>} : memref<1x128xf32, #tpu.memory_space<vmem>>, vector<1x128xf32>,
    return
  }
}

</mosaic_0001>

<llo_original>
// kernel: customize_cost.2
$region0: #{customize_cost.2}
  #allocation0 [shape = 'u32[]', space=smem, size = 0x4, offset = 0x4, fixed_abs, tag = 'smem constant byte address 0x4 - core index']
  #allocation1 [shape = 'u32[72,128]{1,0:T(1,128)}', space=vmem, size = 0x9000, scoped, tag = 'internal scratch']
  #allocation2 [shape = 'u32[2048]{0}', space=vmem, size = 0x2000, scoped, tag = 'scoped memory for customize_cost.2']
  #allocation3 [shape = 'u32[2048]{0}', space=vmem, size = 0x2000, scoped, tag = 'scoped memory for customize_cost.2']
  #allocation4 [shape = 'u32[2048]{0}', space=vmem, size = 0x2000, scoped, tag = 'scoped memory for customize_cost.2']
  #allocation5 [shape = 'u32[2048]{0}', space=vmem, size = 0x2000, scoped, tag = 'scoped memory for customize_cost.2']
  #allocation6 [shape = 'u32[2048]{0}', space=vmem, size = 0x2000, scoped, tag = 'scoped memory for customize_cost.2']
  %s0 = inlined_call_operand.vmem [shape: f32[16,8], index: 0, kind: input, shape index: {}]
  %s1 = inlined_call_operand.<no memory space> [shape: f32[], index: 1, kind: input, shape index: {}]
  %s2 = inlined_call_operand.vmem [shape: f32[1,128], index: 2, kind: output, shape index: {}]
  %s3 = sld [smem:[#allocation0]]
  $region14: #{customize_cost.2} parent=0
    _
  %s5 = ssub.s32 1, %s3
  %s6 = scalar_select 0, %s5, %s3
  %v7 = vstv %s1
  $region1: #{customize_cost.2} parent=0
    #allocation7 [shape = 'u8[8192]{0}', space=vmem, size = 0x2000, dematerialized = true, scoped, tag = 'FusionAdapter Buffer %fusion.1 = f32[16,128]{1,0:T(8,128)} fusion(%param_0.1, %param_1), kind=kLoop, calls=%fused_computation.1.clone, metadata={op_name="jit(customize_cost)/jit(_pad)/pad" stack_frame_id=12}']
    // Predicated region
    $region2: #{customize_cost.2} parent=1 // pred_check
      _
    $region3: #{customize_cost.2} parent=1 // pred_check_branch
      %9 = sbr.rel (0) target = $region5
    $region4: #{customize_cost.2} parent=1 // pred_region
      _
    $region5: #{customize_cost.2} parent=1 // pred_fallthru
      _
    %v10 = vld [vmem:[%s0] sm:$0xff]
    %v11 = vlaneseq
    %v12 = vand.u32 %v11, 127
    %vm14 = vcmp.lt.s32.totalorder %v12, 8
    %v15 = vsel %vm14, %v10, %v7
    %s17 = ssub.s32 256, 1
    %18 = vst [vmem:[#allocation7] sm:%s17] %v15
    %s19 = scalar_lea.vmem %s0, 8
    %v20 = vld [vmem:[%s19] sm:$0xff]
    %v21 = vlaneseq
    %v22 = vand.u32 %v21, 127
    %vm24 = vcmp.lt.s32.totalorder %v22, 8
    %v25 = vsel %vm24, %v20, %v7
    %s26 = scalar_lea.vmem [#allocation7], 8
    %s28 = ssub.s32 256, 1
    %29 = vst [vmem:[%s26] sm:%s28] %v25
    %v30 = vld [vmem:[#allocation7] sm:$0xff]
    %v31 = vld [vmem:[#allocation7 + $0x8] sm:$0xff]
    %v32 = vsub.f32 %v30, %v31
    %v33 = vmul.f32 %v32, %v32
    %v34 = vrot.slane %v33, 2
    %v35 = vadd.f32 %v33, %v34
    %v36 = vrot.slane %v35, 1
    %v37 = vadd.f32 %v35, %v36
    %v38 = vmul.f32 %v30, %v30
    %v39 = vmul.f32 %v31, %v31
    %v40 = vrot.slane %v38, 1
    %v41 = vrot.slane %v39, 1
    %v42 = vlaneseq
    %v43 = vshrl.u32 %v42, 7
    %vm44 = vcmp.lt.s32.totalorder %v43, 7
    %v45 = vsel %vm44, %v40, %v41
    %v46 = vsel %vm44, %v41, %v40
    %v47 = vadd.f32 %v38, %v45
    %v48 = vadd.f32 %v39, %v46
    %v49 = vrot.slane %v38, 2
    %v50 = vrot.slane %v39, 2
    %vm51 = vcmp.lt.s32.totalorder %v43, 6
    %v52 = vsel %vm51, %v49, %v50
    %v53 = vsel %vm51, %v50, %v49
    %v54 = vadd.f32 %v47, %v52
    %v55 = vadd.f32 %v48, %v53
    %v56 = vrsqrt.pop %v54
    %v57 = vmul.f32 %v56, %v54
    %v58 = vmul.f32 %v57, %v56
    %v59 = vmul.f32 0.5, %v58
    %v60 = vsub.f32 1.5, %v59
    %v61 = vmul.f32 %v56, %v60
    %v62 = vmul.f32 %v54, %v61
    %vm63 = vcmp.eq.f32.partialorder %v54, inf
    %v64 = vsel %vm63, %v54, %v62
    %vm65 = vcmp.eq.f32.partialorder %v54, 0.0
    %v66 = vand.u32 %v54, 2147483648
    %v67 = vsel %vm65, %v66, %v64
    %v68 = vrsqrt.pop %v55
    %v69 = vmul.f32 %v68, %v55
    %v70 = vmul.f32 %v69, %v68
    %v71 = vmul.f32 0.5, %v70
    %v72 = vsub.f32 1.5, %v71
    %v73 = vmul.f32 %v68, %v72
    %v74 = vmul.f32 %v55, %v73
    %vm75 = vcmp.eq.f32.partialorder %v55, inf
    %v76 = vsel %vm75, %v55, %v74
    %vm77 = vcmp.eq.f32.partialorder %v55, 0.0
    %v78 = vand.u32 %v55, 2147483648
    %v79 = vsel %vm77, %v78, %v76
    %v80 = vadd.f32 %v67, %v79
    %81 = vrot.lane.b32.xlu0 %v30, 1
    %v82 = vpop.permute.xlu0 %81
    %83 = vrot.lane.b32.xlu0 %v31, 1
    %v84 = vpop.permute.xlu0 %83
    %v85 = vsub.f32 %v30, %v82
    %v86 = vsub.f32 %v31, %v84
    %v87 = vmul.f32 %v85, %v85
    %v88 = vmul.f32 %v86, %v86
    %v89 = vrot.slane %v87, 1
    %v90 = vrot.slane %v88, 1
    %v91 = vsel %vm44, %v89, %v90
    %v92 = vsel %vm44, %v90, %v89
    %v93 = vadd.f32 %v87, %v91
    %v94 = vadd.f32 %v88, %v92
    %v95 = vrot.slane %v87, 2
    %v96 = vrot.slane %v88, 2
    %v97 = vsel %vm51, %v95, %v96
    %v98 = vsel %vm51, %v96, %v95
    %v99 = vadd.f32 %v93, %v97
    %v100 = vadd.f32 %v94, %v98
    %v101 = vlaneseq
    %v102 = vand.u32 %v101, 127
    %vm103 = vcmp.ge.s32.totalorder %v102, 1
    %vm104 = vcmp.le.s32.totalorder %v102, 7
    %vm105 = vmand %vm103, %vm104
    %v106 = vrsqrt.pop %v99
    %v107 = vmul.f32 %v106, %v99
    %v108 = vmul.f32 %v107, %v106
    %v109 = vmul.f32 0.5, %v108
    %v110 = vsub.f32 1.5, %v109
    %v111 = vmul.f32 %v106, %v110
    %v112 = vmul.f32 %v99, %v111
    %vm113 = vcmp.eq.f32.partialorder %v99, inf
    %v114 = vsel %vm113, %v99, %v112
    %vm115 = vcmp.eq.f32.partialorder %v99, 0.0
    %v116 = vand.u32 %v99, 2147483648
    %v117 = vsel %vm115, %v116, %v114
    %v118 = vsel %vm105, %v117, 0.0
    %v119 = vrsqrt.pop %v100
    %v120 = vmul.f32 %v119, %v100
    %v121 = vmul.f32 %v120, %v119
    %v122 = vmul.f32 0.5, %v121
    %v123 = vsub.f32 1.5, %v122
    %v124 = vmul.f32 %v119, %v123
    %v125 = vmul.f32 %v100, %v124
    %vm126 = vcmp.eq.f32.partialorder %v100, inf
    %v127 = vsel %vm126, %v100, %v125
    %vm128 = vcmp.eq.f32.partialorder %v100, 0.0
    %v129 = vand.u32 %v100, 2147483648
    %v130 = vsel %vm128, %v129, %v127
    %v131 = vsel %vm105, %v130, 0.0
    %vm132 = vcmask 1040384
    %v133 = vsel %vm132, %v37, 0.0
    %134 = vadd.xlane.f32.xlu0 %v133
    %v135 = vpop.xlane.xlu0 %134
    %v136 = vrot.slane %v135, 4
    %v137 = vadd.f32 %v135, %v136
    %v138 = vrot.slane %v137, 2
    %v139 = vadd.f32 %v137, %v138
    %v140 = vrot.slane %v139, 1
    %v141 = vadd.f32 %v139, %v140
    %s142 = vtos %v141
    %v144 = vrot.slane %v80, 4
    %v146 = vsel %vm132, %v144, 0.0
    %147 = vadd.xlane.f32.xlu0 %v146
    %v148 = vpop.xlane.xlu0 %147
    %v149 = vrot.slane %v148, 4
    %v150 = vadd.f32 %v148, %v149
    %v151 = vrot.slane %v150, 2
    %v152 = vadd.f32 %v150, %v151
    %v153 = vrot.slane %v152, 1
    %v154 = vadd.f32 %v152, %v153
    %s155 = vtos %v154
    %v157 = vrot.slane %v118, 4
    %v159 = vsel %vm132, %v157, 0.0
    %160 = vadd.xlane.f32.xlu0 %v159
    %v161 = vpop.xlane.xlu0 %160
    %v162 = vrot.slane %v161, 4
    %v163 = vadd.f32 %v161, %v162
    %v164 = vrot.slane %v163, 2
    %v165 = vadd.f32 %v163, %v164
    %v166 = vrot.slane %v165, 1
    %v167 = vadd.f32 %v165, %v166
    %s168 = vtos %v167
    %v170 = vrot.slane %v131, 4
    %v172 = vsel %vm132, %v170, 0.0
    %173 = vadd.xlane.f32.xlu0 %v172
    %v174 = vpop.xlane.xlu0 %173
    %v175 = vrot.slane %v174, 4
    %v176 = vadd.f32 %v174, %v175
    %v177 = vrot.slane %v176, 2
    %v178 = vadd.f32 %v176, %v177
    %v179 = vrot.slane %v178, 1
    %v180 = vadd.f32 %v178, %v179
    %s181 = vtos %v180
    %s182 = smul.f32 %s142, 0.125
    %s183 = smul.f32 %s155, 1.25e-05
    %s184 = smul.f32 %s168, 0.0001
    %s185 = smul.f32 %s181, 0.0001
    %s186 = sadd.f32 %s184, %s185
    %s187 = sadd.f32 %s182, %s183
    %s188 = sadd.f32 %s187, %s186
    %vm189 = vcmp.eq.s32.totalorder %v102, 0
    %v190 = vstv %s188
    %v191 = vsel %vm189, %v190, 0.0
    %vm192 = vcmp.eq.s32.totalorder %v102, 1
    %v193 = vstv %s182
    %v194 = vsel %vm192, %v193, %v191
    %vm195 = vcmp.eq.s32.totalorder %v102, 2
    %v196 = vstv %s183
    %v197 = vsel %vm195, %v196, %v194
    %vm198 = vcmp.eq.s32.totalorder %v102, 3
    %v199 = vstv %s186
    %v200 = vsel %vm198, %v199, %v197
    %201 = vst [vmem:[%s2] sm:$0x1] %v200
    // Predicated region
    $region6: #{customize_cost.2} parent=1 // pred_check
      _
    $region7: #{customize_cost.2} parent=1 // pred_check_branch
      %203 = sbr.rel (0) target = $region9
    $region8: #{customize_cost.2} parent=1 // pred_region
      _
    $region9: #{customize_cost.2} parent=1 // pred_fallthru
      _
    // Predicated region
    $region10: #{customize_cost.2} parent=1 // pred_check
      _
    $region11: #{customize_cost.2} parent=1 // pred_check_branch
      %205 = sbr.rel (0) target = $region13
    $region12: #{customize_cost.2} parent=1 // pred_region
      _
    $region13: #{customize_cost.2} parent=1 // pred_fallthru
      _

</llo_original>
